<compile_context>
chip_gen: v7x
topology: tpu7x:2x2x1
jax: 0.10.0
libtpu: 0.0.40
codegen_flags: <defaults>
</compile_context>

<pallas_src>
import math
import functools

import jax
import jax.numpy as jnp
from jax.experimental import pallas as pl
from jax.experimental.pallas import tpu as pltpu


# ----------------------------- schedule (glue, plain JAX) -----------------------------

def cosine_beta_schedule(timesteps, s=0.008):
    steps = jnp.linspace(0.0, float(timesteps), timesteps + 1)
    f = jnp.cos((steps / timesteps + s) / (1.0 + s) * (math.pi / 2.0)) ** 2
    alphas_cumprod = f / f[0]
    betas = 1.0 - alphas_cumprod[1:] / alphas_cumprod[:-1]
    return jnp.clip(betas, 1e-4, 0.9999)


def sinusoidal_time_embedding(t, dim):
    half = dim // 2
    freqs = jnp.exp(-jnp.log(10000.0) * jnp.arange(half, dtype=jnp.float32) / half)
    args = t.astype(jnp.float32)[:, None] * freqs[None, :]
    return jnp.concatenate([jnp.sin(args), jnp.cos(args)], axis=-1)  # [B, dim]


# ----------------------------------- Pallas kernel -----------------------------------

def _diffusion_loss_kernel(sa_ref, sb_ref,              # SMEM: per-batch q_sample scalars [B]
                           x_ref, noise_ref,            # VMEM: (B, C, HW), HW on lanes
                           cond_ref,                    # VMEM: (hidden, B) conditioning
                           w1t_ref, w2t_ref,            # VMEM: (hidden, C), (C, hidden)
                           loss_ref,                    # VMEM: (1, 1) scalar loss
                           *, inv_n_elems):
    B, C, HW = x_ref.shape
    hidden = w1t_ref.shape[0]

    # elementwise squared-error partials, reduced cross-lane exactly once at the end
    sq_acc = jnp.zeros((C, HW), jnp.float32)

    # single kernel invocation: statically unrolled loop over the (small) batch
    for b in range(B):
        x = x_ref[b]        # (C, HW)  -- lane-dense
        n = noise_ref[b]    # (C, HW)

        # normalize(): x * 2 - 1   (auto_normalize=True)
        xn = x * 2.0 - 1.0

        # q_sample(): sqrt(acp[t]) * x_start + sqrt(1 - acp[t]) * noise
        sa = sa_ref[b]
        sb = sb_ref[b]
        x_noisy = sa * xn + sb * n

        # synthetic conditional model:
        #   first 1x1 conv (K = C = 3) as C broadcast-FMAs on the VPU
        #   (avoids a degenerate K=3 MXU push; output stays lane-dense (hidden, HW))
        h = cond_ref[:, b:b + 1]                       # (hidden, 1) conditioning bias
        for c in range(C):
            h = h + w1t_ref[:, c:c + 1] * x_noisy[c:c + 1, :]   # -> (hidden, HW)
        h = jnp.maximum(h, 0.0)

        #   second 1x1 conv on the MXU: (C, hidden) @ (hidden, HW) -> (C, HW), N lane-dense
        model_out = jnp.dot(w2t_ref[...], h, preferred_element_type=jnp.float32)

        diff = model_out - n
        sq_acc = sq_acc + diff * diff

    # MSE (mean reduction), single cross-lane reduction + single scalar store
    loss_ref[...] = jnp.reshape(jnp.sum(sq_acc) * inv_n_elems, (1, 1))


def conditioned_diffusion_loss(x_bchw_flat, noise_flat, sa_t, sb_t, cond_t, w1t, w2t):
    """x / noise: [B, C, H*W] f32; sa_t / sb_t: [B] f32; cond_t: [hidden, B];
    w1t: [hidden, C]; w2t: [C, hidden]."""
    B, C, HW = x_bchw_flat.shape
    kernel = functools.partial(_diffusion_loss_kernel,
                               inv_n_elems=1.0 / float(B * C * HW))
    loss = pl.pallas_call(
        kernel,
        out_shape=jax.ShapeDtypeStruct((1, 1), jnp.float32),
        in_specs=[
            pl.BlockSpec(memory_space=pltpu.MemorySpace.SMEM),   # sa_t  [B]
            pl.BlockSpec(memory_space=pltpu.MemorySpace.SMEM),   # sb_t  [B]
            pl.BlockSpec(memory_space=pltpu.MemorySpace.VMEM),   # x      (B, C, HW)
            pl.BlockSpec(memory_space=pltpu.MemorySpace.VMEM),   # noise  (B, C, HW)
            pl.BlockSpec(memory_space=pltpu.MemorySpace.VMEM),   # cond_t (hidden, B)
            pl.BlockSpec(memory_space=pltpu.MemorySpace.VMEM),   # w1t    (hidden, C)
            pl.BlockSpec(memory_space=pltpu.MemorySpace.VMEM),   # w2t    (C, hidden)
        ],
        out_specs=pl.BlockSpec(memory_space=pltpu.MemorySpace.VMEM),
    )(sa_t, sb_t, x_bchw_flat, noise_flat, cond_t, w1t, w2t)
    return loss[0, 0]
    # TODO(synk): for real image sizes (HW in the tens of thousands) reintroduce a
    # "parallel" grid over HW tiles with per-tile partial losses (v7x dual-TC, VMEM).


# --------------------------------- pure-JAX reference ---------------------------------

def reference_loss(x_nchw, noise_nchw, sa_t, sb_t, cond, w1, w2):
    B, C, H, W = x_nchw.shape
    xn = x_nchw * 2.0 - 1.0
    x_noisy = sa_t[:, None, None, None] * xn + sb_t[:, None, None, None] * noise_nchw
    xf = x_noisy.reshape(B, C, H * W)          # (B, C, HW)
    nf = noise_nchw.reshape(B, C, H * W)
    h = jnp.maximum(jnp.einsum("bcp,ch->bhp", xf, w1) + cond[:, :, None], 0.0)
    out = jnp.einsum("bhp,hc->bcp", h, w2)
    return jnp.mean((out - nf) ** 2)


# --------------------------------------- main -----------------------------------------

if __name__ == "__main__":
    B, C, H, W = 2, 3, 16, 16          # small 16x16 patches (module uses 3-channel images)
    HW = H * W
    HIDDEN = 32                        # synthetic model hidden channels
    GDIM = 768                         # global_features dim (matches sample() default)
    TEMB = 32                          # time-embedding dim
    TIMESTEPS = 100

    key = jax.random.PRNGKey(0)
    k_x, k_g, k_t, k_noise, k_w1, k_w2, k_wt, k_wg = jax.random.split(key, 8)

    # inputs
    x = jax.random.uniform(k_x, (B, C, H, W), dtype=jnp.float32)            # image in [0,1]
    global_features = jax.random.normal(k_g, (B, GDIM), dtype=jnp.float32)

    # deterministic synthetic-model parameters
    w1 = 0.2 * jax.random.normal(k_w1, (C, HIDDEN), dtype=jnp.float32)
    w2 = 0.2 * jax.random.normal(k_w2, (HIDDEN, C), dtype=jnp.float32)
    wt = 0.2 * jax.random.normal(k_wt, (TEMB, HIDDEN), dtype=jnp.float32)
    wg = 0.05 * jax.random.normal(k_wg, (GDIM, HIDDEN), dtype=jnp.float32)

    # diffusion schedule (cosine) -- matches _cosine_beta_schedule
    betas = cosine_beta_schedule(TIMESTEPS)
    alphas = 1.0 - betas
    alphas_cumprod = jnp.cumprod(alphas, axis=0)
    sqrt_alphas_cumprod = jnp.sqrt(alphas_cumprod)
    sqrt_one_minus_alphas_cumprod = jnp.sqrt(1.0 - alphas_cumprod)

    # forward(): sample timesteps and noise (deterministic RNG stands in for torch RNG)
    t = jax.random.randint(k_t, (B,), 0, TIMESTEPS)
    noise = jax.random.normal(k_noise, (B, C, H, W), dtype=jnp.float32)

    sa_t = sqrt_alphas_cumprod[t].astype(jnp.float32)               # [B]
    sb_t = sqrt_one_minus_alphas_cumprod[t].astype(jnp.float32)     # [B]

    # per-batch conditioning vector (glue): time embedding + global-feature projection
    cond = sinusoidal_time_embedding(t, TEMB) @ wt + global_features @ wg   # [B, HIDDEN]

    # kernel layout: keep NCHW, flatten H*W onto lanes; transpose weights/conditioning
    x_flat = x.reshape(B, C, HW)             # (B, C, HW)
    noise_flat = noise.reshape(B, C, HW)
    cond_t = cond.T                          # (HIDDEN, B)
    w1t = w1.T                               # (HIDDEN, C)
    w2t = w2.T                               # (C, HIDDEN)

    loss = conditioned_diffusion_loss(x_flat, noise_flat, sa_t, sb_t, cond_t, w1t, w2t)
    loss = jax.block_until_ready(loss)

    ref = reference_loss(x, noise, sa_t, sb_t, cond, w1, w2)
    assert jnp.isfinite(loss), "kernel produced non-finite loss"
    assert jnp.allclose(loss, ref, rtol=1e-2, atol=1e-4), (loss, ref)

    print("KERNEL_OK")
</pallas_src>

<mosaic_0001>
module attributes {stable_mosaic.version = 11 : i64} {
  func.func @_diffusion_loss_kernel(%arg0: memref<2xf32, #tpu.memory_space<smem>>, %arg1: memref<2xf32, #tpu.memory_space<smem>>, %arg2: memref<2x3x256xf32, #tpu.memory_space<vmem>>, %arg3: memref<2x3x256xf32, #tpu.memory_space<vmem>>, %arg4: memref<32x2xf32, #tpu.memory_space<vmem>>, %arg5: memref<32x3xf32, #tpu.memory_space<vmem>>, %arg6: memref<3x32xf32, #tpu.memory_space<vmem>>, %arg7: memref<1x1xf32, #tpu.memory_space<vmem>>) attributes {dimension_semantics = [], scalar_prefetch = 0 : i64, scratch_operands = 0 : i64, tpu.core_type = #tpu.core_type<tc>} {
    %cst = arith.constant 0.000000e+00 : f32
    %0 = vector.broadcast %cst : f32 to vector<3x256xf32>
    %c0 = arith.constant 0 : index
    %c0_0 = arith.constant 0 : index
    %c0_1 = arith.constant 0 : index
    %1 = vector.load %arg2[%c0, %c0_0, %c0_1] : memref<2x3x256xf32, #tpu.memory_space<vmem>>, vector<1x3x256xf32>
    %2 = vector.shape_cast %1 : vector<1x3x256xf32> to vector<3x256xf32>
    %c0_2 = arith.constant 0 : index
    %c0_3 = arith.constant 0 : index
    %c0_4 = arith.constant 0 : index
    %3 = vector.load %arg3[%c0_2, %c0_3, %c0_4] : memref<2x3x256xf32, #tpu.memory_space<vmem>>, vector<1x3x256xf32>
    %4 = vector.shape_cast %3 : vector<1x3x256xf32> to vector<3x256xf32>
    %cst_5 = arith.constant 2.000000e+00 : f32
    %5 = vector.broadcast %cst_5 : f32 to vector<3x256xf32>
    %6 = arith.mulf %2, %5 : vector<3x256xf32>
    %cst_6 = arith.constant 1.000000e+00 : f32
    %7 = vector.broadcast %cst_6 : f32 to vector<3x256xf32>
    %8 = arith.subf %6, %7 : vector<3x256xf32>
    %c0_7 = arith.constant 0 : index
    %9 = memref.load %arg0[%c0_7] : memref<2xf32, #tpu.memory_space<smem>>
    %c0_8 = arith.constant 0 : index
    %10 = memref.load %arg1[%c0_8] : memref<2xf32, #tpu.memory_space<smem>>
    %11 = vector.broadcast %9 : f32 to vector<3x256xf32>
    %12 = arith.mulf %11, %8 : vector<3x256xf32>
    %13 = vector.broadcast %10 : f32 to vector<3x256xf32>
    %14 = arith.mulf %13, %4 : vector<3x256xf32>
    %15 = arith.addf %12, %14 : vector<3x256xf32>
    %c0_9 = arith.constant 0 : index
    %c0_10 = arith.constant 0 : index
    %16 = vector.load %arg4[%c0_9, %c0_10] : memref<32x2xf32, #tpu.memory_space<vmem>>, vector<32x1xf32>
    %c0_11 = arith.constant 0 : index
    %c0_12 = arith.constant 0 : index
    %17 = vector.load %arg5[%c0_11, %c0_12] : memref<32x3xf32, #tpu.memory_space<vmem>>, vector<32x1xf32>
    %18 = vector.extract_strided_slice %15 {offsets = [0, 0], sizes = [1, 256], strides = [1, 1]} : vector<3x256xf32> to vector<1x256xf32>
    %19 = vector.broadcast %17 : vector<32x1xf32> to vector<32x256xf32>
    %20 = vector.broadcast %18 : vector<1x256xf32> to vector<32x256xf32>
    %21 = arith.mulf %19, %20 : vector<32x256xf32>
    %22 = vector.broadcast %16 : vector<32x1xf32> to vector<32x256xf32>
    %23 = arith.addf %22, %21 : vector<32x256xf32>
    %c0_13 = arith.constant 0 : index
    %c1 = arith.constant 1 : index
    %24 = vector.load %arg5[%c0_13, %c1] : memref<32x3xf32, #tpu.memory_space<vmem>>, vector<32x1xf32>
    %25 = vector.extract_strided_slice %15 {offsets = [1, 0], sizes = [1, 256], strides = [1, 1]} : vector<3x256xf32> to vector<1x256xf32>
    %26 = vector.broadcast %24 : vector<32x1xf32> to vector<32x256xf32>
    %27 = vector.broadcast %25 : vector<1x256xf32> to vector<32x256xf32>
    %28 = arith.mulf %26, %27 : vector<32x256xf32>
    %29 = arith.addf %23, %28 : vector<32x256xf32>
    %c0_14 = arith.constant 0 : index
    %c2 = arith.constant 2 : index
    %30 = vector.load %arg5[%c0_14, %c2] : memref<32x3xf32, #tpu.memory_space<vmem>>, vector<32x1xf32>
    %31 = vector.extract_strided_slice %15 {offsets = [2, 0], sizes = [1, 256], strides = [1, 1]} : vector<3x256xf32> to vector<1x256xf32>
    %32 = vector.broadcast %30 : vector<32x1xf32> to vector<32x256xf32>
    %33 = vector.broadcast %31 : vector<1x256xf32> to vector<32x256xf32>
    %34 = arith.mulf %32, %33 : vector<32x256xf32>
    %35 = arith.addf %29, %34 : vector<32x256xf32>
    %cst_15 = arith.constant 0.000000e+00 : f32
    %36 = vector.broadcast %cst_15 : f32 to vector<32x256xf32>
    %37 = arith.maximumf %35, %36 : vector<32x256xf32>
    %c0_16 = arith.constant 0 : index
    %c0_17 = arith.constant 0 : index
    %38 = vector.load %arg6[%c0_16, %c0_17] : memref<3x32xf32, #tpu.memory_space<vmem>>, vector<3x32xf32>
    %cst_18 = arith.constant dense<0.000000e+00> : vector<3x256xf32>
    %39 = tpu.matmul %38, %37, %cst_18 {dimension_numbers = #tpu.dot_dimension_numbers<[1], [0], [0], [1], [0, 0, 1, 1], [], []>} : vector<3x32xf32>, vector<32x256xf32>, vector<3x256xf32> -> vector<3x256xf32>
    %40 = arith.subf %39, %4 : vector<3x256xf32>
    %41 = arith.mulf %40, %40 : vector<3x256xf32>
    %42 = arith.addf %0, %41 : vector<3x256xf32>
    %c1_19 = arith.constant 1 : index
    %c0_20 = arith.constant 0 : index
    %c0_21 = arith.constant 0 : index
    %43 = vector.load %arg2[%c1_19, %c0_20, %c0_21] : memref<2x3x256xf32, #tpu.memory_space<vmem>>, vector<1x3x256xf32>
    %44 = vector.shape_cast %43 : vector<1x3x256xf32> to vector<3x256xf32>
    %c1_22 = arith.constant 1 : index
    %c0_23 = arith.constant 0 : index
    %c0_24 = arith.constant 0 : index
    %45 = vector.load %arg3[%c1_22, %c0_23, %c0_24] : memref<2x3x256xf32, #tpu.memory_space<vmem>>, vector<1x3x256xf32>
    %46 = vector.shape_cast %45 : vector<1x3x256xf32> to vector<3x256xf32>
    %cst_25 = arith.constant 2.000000e+00 : f32
    %47 = vector.broadcast %cst_25 : f32 to vector<3x256xf32>
    %48 = arith.mulf %44, %47 : vector<3x256xf32>
    %cst_26 = arith.constant 1.000000e+00 : f32
    %49 = vector.broadcast %cst_26 : f32 to vector<3x256xf32>
    %50 = arith.subf %48, %49 : vector<3x256xf32>
    %c1_27 = arith.constant 1 : index
    %51 = memref.load %arg0[%c1_27] : memref<2xf32, #tpu.memory_space<smem>>
    %c1_28 = arith.constant 1 : index
    %52 = memref.load %arg1[%c1_28] : memref<2xf32, #tpu.memory_space<smem>>
    %53 = vector.broadcast %51 : f32 to vector<3x256xf32>
    %54 = arith.mulf %53, %50 : vector<3x256xf32>
    %55 = vector.broadcast %52 : f32 to vector<3x256xf32>
    %56 = arith.mulf %55, %46 : vector<3x256xf32>
    %57 = arith.addf %54, %56 : vector<3x256xf32>
    %c0_29 = arith.constant 0 : index
    %c1_30 = arith.constant 1 : index
    %58 = vector.load %arg4[%c0_29, %c1_30] : memref<32x2xf32, #tpu.memory_space<vmem>>, vector<32x1xf32>
    %c0_31 = arith.constant 0 : index
    %c0_32 = arith.constant 0 : index
    %59 = vector.load %arg5[%c0_31, %c0_32] : memref<32x3xf32, #tpu.memory_space<vmem>>, vector<32x1xf32>
    %60 = vector.extract_strided_slice %57 {offsets = [0, 0], sizes = [1, 256], strides = [1, 1]} : vector<3x256xf32> to vector<1x256xf32>
    %61 = vector.broadcast %59 : vector<32x1xf32> to vector<32x256xf32>
    %62 = vector.broadcast %60 : vector<1x256xf32> to vector<32x256xf32>
    %63 = arith.mulf %61, %62 : vector<32x256xf32>
    %64 = vector.broadcast %58 : vector<32x1xf32> to vector<32x256xf32>
    %65 = arith.addf %64, %63 : vector<32x256xf32>
    %c0_33 = arith.constant 0 : index
    %c1_34 = arith.constant 1 : index
    %66 = vector.load %arg5[%c0_33, %c1_34] : memref<32x3xf32, #tpu.memory_space<vmem>>, vector<32x1xf32>
    %67 = vector.extract_strided_slice %57 {offsets = [1, 0], sizes = [1, 256], strides = [1, 1]} : vector<3x256xf32> to vector<1x256xf32>
    %68 = vector.broadcast %66 : vector<32x1xf32> to vector<32x256xf32>
    %69 = vector.broadcast %67 : vector<1x256xf32> to vector<32x256xf32>
    %70 = arith.mulf %68, %69 : vector<32x256xf32>
    %71 = arith.addf %65, %70 : vector<32x256xf32>
    %c0_35 = arith.constant 0 : index
    %c2_36 = arith.constant 2 : index
    %72 = vector.load %arg5[%c0_35, %c2_36] : memref<32x3xf32, #tpu.memory_space<vmem>>, vector<32x1xf32>
    %73 = vector.extract_strided_slice %57 {offsets = [2, 0], sizes = [1, 256], strides = [1, 1]} : vector<3x256xf32> to vector<1x256xf32>
    %74 = vector.broadcast %72 : vector<32x1xf32> to vector<32x256xf32>
    %75 = vector.broadcast %73 : vector<1x256xf32> to vector<32x256xf32>
    %76 = arith.mulf %74, %75 : vector<32x256xf32>
    %77 = arith.addf %71, %76 : vector<32x256xf32>
    %cst_37 = arith.constant 0.000000e+00 : f32
    %78 = vector.broadcast %cst_37 : f32 to vector<32x256xf32>
    %79 = arith.maximumf %77, %78 : vector<32x256xf32>
    %c0_38 = arith.constant 0 : index
    %c0_39 = arith.constant 0 : index
    %80 = vector.load %arg6[%c0_38, %c0_39] : memref<3x32xf32, #tpu.memory_space<vmem>>, vector<3x32xf32>
    %cst_40 = arith.constant dense<0.000000e+00> : vector<3x256xf32>
    %81 = tpu.matmul %80, %79, %cst_40 {dimension_numbers = #tpu.dot_dimension_numbers<[1], [0], [0], [1], [0, 0, 1, 1], [], []>} : vector<3x32xf32>, vector<32x256xf32>, vector<3x256xf32> -> vector<3x256xf32>
    %82 = arith.subf %81, %46 : vector<3x256xf32>
    %83 = arith.mulf %82, %82 : vector<3x256xf32>
    %84 = arith.addf %42, %83 : vector<3x256xf32>
    %85 = vector.shape_cast %84 : vector<3x256xf32> to vector<1x3x256xf32>
    %cst_41 = arith.constant dense<0.000000e+00> : vector<1xf32>
    %86 = vector.multi_reduction <add>, %85, %cst_41 [1, 2] : vector<1x3x256xf32> to vector<1xf32>
    %87 = vector.shape_cast %86 : vector<1xf32> to vector<1x1x1xf32>
    %88 = vector.extract %87[0, 0, 0] : f32 from vector<1x1x1xf32>
    %cst_42 = arith.constant 6.51041686E-4 : f32
    %89 = arith.mulf %88, %cst_42 : f32
    %90 = vector.broadcast %89 : f32 to vector<1x1xf32>
    %c0_43 = arith.constant 0 : index
    %c0_44 = arith.constant 0 : index
    %91 = vector.load %arg7[%c0_43, %c0_44] : memref<1x1xf32, #tpu.memory_space<vmem>>, vector<1x1xf32>
    tpu.vector_store %arg7[%c0_43, %c0_44], %90 {strides = array<i32>} : memref<1x1xf32, #tpu.memory_space<vmem>>, vector<1x1xf32>,
    return
  }
}

</mosaic_0001>

<llo_original>
// kernel: tpu_custom_call.1
$region0: #{tpu_custom_call.1}
  #allocation0 [shape = 'u32[]', space=smem, size = 0x4, offset = 0x4, fixed_abs, tag = 'smem constant byte address 0x4 - core index']
  #allocation1 [shape = 'u32[144,128]{1,0:T(1,128)}', space=vmem, size = 0x12000, scoped, tag = 'internal scratch']
  %s0 = inlined_call_operand.vmem [shape: f32[2], index: 0, kind: input, shape index: {}]
  %s1 = inlined_call_operand.vmem [shape: f32[2], index: 1, kind: input, shape index: {}]
  %s2 = inlined_call_operand.vmem [shape: f32[2,3,256], index: 2, kind: input, shape index: {}]
  %s3 = inlined_call_operand.vmem [shape: f32[2,3,256], index: 3, kind: input, shape index: {}]
  %s4 = inlined_call_operand.vmem [shape: f32[32,2], index: 4, kind: input, shape index: {}]
  %s5 = inlined_call_operand.vmem [shape: f32[32,3], index: 5, kind: input, shape index: {}]
  %s6 = inlined_call_operand.vmem [shape: f32[3,32], index: 6, kind: input, shape index: {}]
  %s7 = inlined_call_operand.hbm [shape: f32[1,1], index: 7, kind: output, shape index: {}]
  %s8 = sld [smem:[#allocation0]]
  $region46: #{tpu_custom_call.1} parent=0
    _
  %s10 = ssub.s32 1, %s8
  %s11 = scalar_select 0, %s10, %s8
  $region1: #{tpu_custom_call.1} parent=0
    #allocation2 [shape = 'u8[512]{0}', space=smem, size = 0x200, scoped, tag = 'input window, operand 0, single buffered']
    #allocation3 [shape = 's32[1]{0}', space=sflag, size = 0x4, scoped, tag = 'scoped memory for tpu_custom_call.1']
    #allocation4 [shape = 's32[1]{0}', space=sflag, size = 0x4, scoped, tag = 'scoped memory for tpu_custom_call.1']
    #allocation5 [shape = 'u8[512]{0}', space=smem, size = 0x200, scoped, tag = 'input window, operand 1, single buffered']
    #allocation6 [shape = 's32[1]{0}', space=sflag, size = 0x4, scoped, tag = 'scoped memory for tpu_custom_call.1']
    #allocation7 [shape = 'u8[512]{0}', space=vmem, size = 0x400, scoped, tag = 'output window, operand 0, single buffered']
    %12 = vsyncpa [#allocation4], 0
    %13 = vsyncpa [#allocation6], 0
    %14 = vsyncpa [#allocation3], 0
    // Predicated region
    $region2: #{tpu_custom_call.1} parent=1 // pred_check
      _
    $region3: #{tpu_custom_call.1} parent=1 // pred_check_branch
      %16 = sbr.rel (0) target = $region5
    $region4: #{tpu_custom_call.1} parent=1 // pred_region
      %s18 = ssub.s32 16, 16
      %19 = vsyncadd [#allocation4], %s18
      %s21 = sshll.u32 %s0, 4
      %s22 = int_to_ptr.vmem [resolvable:$true] %s21
      %24 = dma.vmem_to_smem %s22, 16, [#allocation2], [#allocation4]
    $region5: #{tpu_custom_call.1} parent=1 // pred_fallthru
      _
    // Predicated region
    $region6: #{tpu_custom_call.1} parent=1 // pred_check
      _
    $region7: #{tpu_custom_call.1} parent=1 // pred_check_branch
      %26 = sbr.rel (0) target = $region9
    $region8: #{tpu_custom_call.1} parent=1 // pred_region
      %s28 = ssub.s32 16, 16
      %29 = vsyncadd [#allocation6], %s28
      %s31 = sshll.u32 %s1, 4
      %s32 = int_to_ptr.vmem [resolvable:$true] %s31
      %34 = dma.vmem_to_smem %s32, 16, [#allocation5], [#allocation6]
    $region9: #{tpu_custom_call.1} parent=1 // pred_fallthru
      _
    // Predicated region
    $region10: #{tpu_custom_call.1} parent=1 // pred_check
      _
    $region11: #{tpu_custom_call.1} parent=1 // pred_check_branch
      %36 = sbr.rel (0) target = $region13
    $region12: #{tpu_custom_call.1} parent=1 // pred_region
      _
    $region13: #{tpu_custom_call.1} parent=1 // pred_fallthru
      _
    // Predicated region
    $region14: #{tpu_custom_call.1} parent=1 // pred_check
      _
    $region15: #{tpu_custom_call.1} parent=1 // pred_check_branch
      %38 = sbr.rel (0) target = $region17
    $region16: #{tpu_custom_call.1} parent=1 // pred_region
      _
    $region17: #{tpu_custom_call.1} parent=1 // pred_fallthru
      _
    // Predicated region
    $region18: #{tpu_custom_call.1} parent=1 // pred_check
      _
    $region19: #{tpu_custom_call.1} parent=1 // pred_check_branch
      %40 = sbr.rel (0) target = $region21
    $region20: #{tpu_custom_call.1} parent=1 // pred_region
      _
    $region21: #{tpu_custom_call.1} parent=1 // pred_fallthru
      _
    // Predicated region
    $region22: #{tpu_custom_call.1} parent=1 // pred_check
      _
    $region23: #{tpu_custom_call.1} parent=1 // pred_check_branch
      %42 = sbr.rel (0) target = $region25
    $region24: #{tpu_custom_call.1} parent=1 // pred_region
      _
    $region25: #{tpu_custom_call.1} parent=1 // pred_fallthru
      _
    // Predicated region
    $region26: #{tpu_custom_call.1} parent=1 // pred_check
      _
    $region27: #{tpu_custom_call.1} parent=1 // pred_check_branch
      %44 = sbr.rel (0) target = $region29
    $region28: #{tpu_custom_call.1} parent=1 // pred_region
      _
    $region29: #{tpu_custom_call.1} parent=1 // pred_fallthru
      _
    // Predicated region
    $region30: #{tpu_custom_call.1} parent=1 // pred_check
      _
    $region31: #{tpu_custom_call.1} parent=1 // pred_check_branch
      %46 = sbr.rel (0) target = $region33
    $region32: #{tpu_custom_call.1} parent=1 // pred_region
      %47 = dma.done [#allocation4], 16
    $region33: #{tpu_custom_call.1} parent=1 // pred_fallthru
      _
    // Predicated region
    $region34: #{tpu_custom_call.1} parent=1 // pred_check
      _
    $region35: #{tpu_custom_call.1} parent=1 // pred_check_branch
      %49 = sbr.rel (0) target = $region37
    $region36: #{tpu_custom_call.1} parent=1 // pred_region
      %50 = dma.done [#allocation6], 16
    $region37: #{tpu_custom_call.1} parent=1 // pred_fallthru
      _
    %51 = sfence
    %v52 = vld [vmem:[%s2] sm:$0x77]
    %v53 = vld [vmem:[%s3] sm:$0x77]
    %v54 = vmul.f32 %v52, 2.0
    %v55 = vsub.f32 %v54, 1.0
    %s56 = sld [smem:[#allocation2]]
    %s57 = sld [smem:[#allocation5]]
    %v58 = vstv %s56
    %v59 = vmul.f32 %v58, %v55
    %v60 = vstv %s57
    %v61 = vmul.f32 %v60, %v53
    %v62 = vadd.f32 %v59, %v61
    %v63 = vld [vmem:[%s4] sm:$0xff]
    %v64 = vld [vmem:[%s4 + $0x8] sm:$0xff]
    %v65 = vld [vmem:[%s4 + $0x10] sm:$0xff]
    %v66 = vld [vmem:[%s4 + $0x18] sm:$0xff]
    %v67 = vld [vmem:[%s5] sm:$0xff]
    %v68 = vld [vmem:[%s5 + $0x8] sm:$0xff]
    %v69 = vld [vmem:[%s5 + $0x10] sm:$0xff]
    %v70 = vld [vmem:[%s5 + $0x18] sm:$0xff]
    %72 = vset.pattern.permute.xlu0 0
    %73 = vperm.xlu0 %72, %v67
    %v74 = vpop.permute.xlu0 %73
    %77 = vset.pattern.permute.xlu0 0
    %78 = vperm.xlu0 %77, %v68
    %v79 = vpop.permute.xlu0 %78
    %82 = vset.pattern.permute.xlu0 0
    %83 = vperm.xlu0 %82, %v69
    %v84 = vpop.permute.xlu0 %83
    %87 = vset.pattern.permute.xlu0 0
    %88 = vperm.xlu0 %87, %v70
    %v89 = vpop.permute.xlu0 %88
    %v92 = vlaneseq
    %v93 = vshrl.u32 %v92, 7
    %v94 = vsub.s32 0, %v93
    %v95 = vrot.slane %v62, %v94
    %v96 = vlaneseq
    %v97 = vshrl.u32 %v96, 7
    %v98 = vsub.s32 4, %v97
    %v99 = vrot.slane %v62, %v98
    %v102 = vlaneseq
    %v103 = vshrl.u32 %v102, 7
    %v104 = vsub.s32 0, %v103
    %v105 = vrot.slane %v95, %v104
    %v106 = vlaneseq
    %v107 = vshrl.u32 %v106, 7
    %v108 = vsub.s32 0, %v107
    %v109 = vrot.slane %v99, %v108
    %v110 = vmul.f32 %v74, %v105
    %v111 = vmul.f32 %v74, %v109
    %v112 = vmul.f32 %v79, %v105
    %v113 = vmul.f32 %v79, %v109
    %v114 = vmul.f32 %v84, %v105
    %v115 = vmul.f32 %v84, %v109
    %v116 = vmul.f32 %v89, %v105
    %v117 = vmul.f32 %v89, %v109
    %119 = vset.pattern.permute.xlu0 0
    %120 = vperm.xlu0 %119, %v63
    %v121 = vpop.permute.xlu0 %120
    %124 = vset.pattern.permute.xlu0 0
    %125 = vperm.xlu0 %124, %v64
    %v126 = vpop.permute.xlu0 %125
    %129 = vset.pattern.permute.xlu0 0
    %130 = vperm.xlu0 %129, %v65
    %v131 = vpop.permute.xlu0 %130
    %134 = vset.pattern.permute.xlu0 0
    %135 = vperm.xlu0 %134, %v66
    %v136 = vpop.permute.xlu0 %135
    %v138 = vadd.f32 %v121, %v110
    %v139 = vadd.f32 %v121, %v111
    %v140 = vadd.f32 %v126, %v112
    %v141 = vadd.f32 %v126, %v113
    %v142 = vadd.f32 %v131, %v114
    %v143 = vadd.f32 %v131, %v115
    %v144 = vadd.f32 %v136, %v116
    %v145 = vadd.f32 %v136, %v117
    %146 = vset.pattern.permute.xlu0 1
    %147 = vperm.xlu0 %146, %v67
    %v148 = vpop.permute.xlu0 %147
    %150 = vset.pattern.permute.xlu0 1
    %151 = vperm.xlu0 %150, %v68
    %v152 = vpop.permute.xlu0 %151
    %154 = vset.pattern.permute.xlu0 1
    %155 = vperm.xlu0 %154, %v69
    %v156 = vpop.permute.xlu0 %155
    %158 = vset.pattern.permute.xlu0 1
    %159 = vperm.xlu0 %158, %v70
    %v160 = vpop.permute.xlu0 %159
    %v162 = vlaneseq
    %v163 = vshrl.u32 %v162, 7
    %v164 = vsub.s32 1, %v163
    %v165 = vrot.slane %v62, %v164
    %v166 = vlaneseq
    %v167 = vshrl.u32 %v166, 7
    %v168 = vsub.s32 5, %v167
    %v169 = vrot.slane %v62, %v168
    %v172 = vlaneseq
    %v173 = vshrl.u32 %v172, 7
    %v174 = vsub.s32 1, %v173
    %v175 = vrot.slane %v165, %v174
    %v176 = vlaneseq
    %v177 = vshrl.u32 %v176, 7
    %v178 = vsub.s32 1, %v177
    %v179 = vrot.slane %v169, %v178
    %v180 = vmul.f32 %v148, %v175
    %v181 = vmul.f32 %v148, %v179
    %v182 = vmul.f32 %v152, %v175
    %v183 = vmul.f32 %v152, %v179
    %v184 = vmul.f32 %v156, %v175
    %v185 = vmul.f32 %v156, %v179
    %v186 = vmul.f32 %v160, %v175
    %v187 = vmul.f32 %v160, %v179
    %v188 = vadd.f32 %v138, %v180
    %v189 = vadd.f32 %v139, %v181
    %v190 = vadd.f32 %v140, %v182
    %v191 = vadd.f32 %v141, %v183
    %v192 = vadd.f32 %v142, %v184
    %v193 = vadd.f32 %v143, %v185
    %v194 = vadd.f32 %v144, %v186
    %v195 = vadd.f32 %v145, %v187
    %196 = vset.pattern.permute.xlu0 2
    %197 = vperm.xlu0 %196, %v67
    %v198 = vpop.permute.xlu0 %197
    %200 = vset.pattern.permute.xlu0 2
    %201 = vperm.xlu0 %200, %v68
    %v202 = vpop.permute.xlu0 %201
    %204 = vset.pattern.permute.xlu0 2
    %205 = vperm.xlu0 %204, %v69
    %v206 = vpop.permute.xlu0 %205
    %208 = vset.pattern.permute.xlu0 2
    %209 = vperm.xlu0 %208, %v70
    %v210 = vpop.permute.xlu0 %209
    %v212 = vlaneseq
    %v213 = vshrl.u32 %v212, 7
    %v214 = vsub.s32 2, %v213
    %v215 = vrot.slane %v62, %v214
    %v216 = vlaneseq
    %v217 = vshrl.u32 %v216, 7
    %v218 = vsub.s32 6, %v217
    %v219 = vrot.slane %v62, %v218
    %v222 = vlaneseq
    %v223 = vshrl.u32 %v222, 7
    %v224 = vsub.s32 2, %v223
    %v225 = vrot.slane %v215, %v224
    %v226 = vlaneseq
    %v227 = vshrl.u32 %v226, 7
    %v228 = vsub.s32 2, %v227
    %v229 = vrot.slane %v219, %v228
    %v230 = vmul.f32 %v198, %v225
    %v231 = vmul.f32 %v198, %v229
    %v232 = vmul.f32 %v202, %v225
    %v233 = vmul.f32 %v202, %v229
    %v234 = vmul.f32 %v206, %v225
    %v235 = vmul.f32 %v206, %v229
    %v236 = vmul.f32 %v210, %v225
    %v237 = vmul.f32 %v210, %v229
    %v238 = vadd.f32 %v188, %v230
    %v239 = vadd.f32 %v189, %v231
    %v240 = vadd.f32 %v190, %v232
    %v241 = vadd.f32 %v191, %v233
    %v242 = vadd.f32 %v192, %v234
    %v243 = vadd.f32 %v193, %v235
    %v244 = vadd.f32 %v194, %v236
    %v245 = vadd.f32 %v195, %v237
    %v246 = vmax.f32 %v238, 0.0
    %v247 = vmax.f32 %v239, 0.0
    %v248 = vmax.f32 %v240, 0.0
    %v249 = vmax.f32 %v241, 0.0
    %v250 = vmax.f32 %v242, 0.0
    %v251 = vmax.f32 %v243, 0.0
    %v252 = vmax.f32 %v244, 0.0
    %v253 = vmax.f32 %v245, 0.0
    %v254 = vld [vmem:[%s6] sm:$0x7]
    %vm255 = vcmask 261120
    %v257 = vsel %vm255, %v254, 0
    %259 = vmatprep.subr.mxu0 %v247
    %260 = vmatpush1.msra.mxu0 %v246
    %261 = vmatprep.subr.mxu0 %v249
    %262 = vmatpush1.msra.mxu0 %v248
    %263 = vmatprep.subr.mxu0 %v251
    %264 = vmatpush1.msra.mxu0 %v250
    %265 = vmatprep.subr.mxu0 %v253
    %266 = vmatpush1.msra.mxu0 %v252
    %267 = vmatprep.subr.mxu0 0.0
    %268 = vmatpush1.msra.mxu0 0.0
    %269 = vmatprep.subr.mxu0 0.0
    %270 = vmatpush1.msra.mxu0 0.0
    %271 = vmatprep.subr.mxu0 0.0
    %272 = vmatpush1.msra.mxu0 0.0
    %273 = vmatprep.subr.mxu0 0.0
    %274 = vmatpush1.msra.mxu0 0.0
    %275 = vmatprep.subr.mxu0 0.0
    %276 = vmatpush1.msra.mxu0 0.0
    %277 = vmatprep.subr.mxu0 0.0
    %278 = vmatpush1.msra.mxu0 0.0
    %279 = vmatprep.subr.mxu0 0.0
    %280 = vmatpush1.msra.mxu0 0.0
    %281 = vmatprep.subr.mxu0 0.0
    %282 = vmatpush1.msra.mxu0 0.0
    %283 = vmatprep.subr.mxu0 0.0
    %284 = vmatpush1.msra.mxu0 0.0
    %285 = vmatprep.subr.mxu0 0.0
    %286 = vmatpush1.msra.mxu0 0.0
    %287 = vmatprep.subr.mxu0 0.0
    %288 = vmatpush1.msra.mxu0 0.0
    %289 = vmatprep.subr.mxu0 0.0
    %290 = vmatpush1.msra.mxu0 0.0
    %291 = vmatprep.subr.mxu0 0.0
    %292 = vmatpush1.msra.mxu0 0.0
    %293 = vmatprep.subr.mxu0 0.0
    %294 = vmatpush1.msra.mxu0 0.0
    %295 = vmatprep.subr.mxu0 0.0
    %296 = vmatpush1.msra.mxu0 0.0
    %297 = vmatprep.subr.mxu0 0.0
    %298 = vmatpush1.msra.mxu0 0.0
    %299 = vmatprep.subr.mxu0 0.0
    %300 = vmatpush1.msra.mxu0 0.0
    %301 = vmatprep.subr.mxu0 0.0
    %302 = vmatpush1.msra.mxu0 0.0
    %303 = vmatprep.subr.mxu0 0.0
    %304 = vmatpush1.msra.mxu0 0.0
    %305 = vmatprep.subr.mxu0 0.0
    %306 = vmatpush1.msra.mxu0 0.0
    %307 = vmatprep.subr.mxu0 0.0
    %308 = vmatpush1.msra.mxu0 0.0
    %309 = vmatprep.subr.mxu0 0.0
    %310 = vmatpush1.msra.mxu0 0.0
    %311 = vmatprep.subr.mxu0 0.0
    %312 = vmatpush1.msra.mxu0 0.0
    %313 = vmatprep.subr.mxu0 0.0
    %314 = vmatpush1.msra.mxu0 0.0
    %315 = vmatprep.subr.mxu0 0.0
    %316 = vmatpush1.msra.mxu0 0.0
    %317 = vmatprep.subr.mxu0 0.0
    %318 = vmatpush1.msra.mxu0 0.0
    %319 = vmatprep.subr.mxu0 0.0
    %320 = vmatpush1.msra.mxu0 0.0
    %321 = vmatprep.subr.mxu0 0.0
    %322 = vmatpush1.msra.mxu0 0.0
    %323 = vmatprep.mubr.f32.mxu0 0.0
    %324 = vmatmul.mubr.f32.gmra.mrb[0].mxu0 %v257
    %v325 = vpop.f32.mrb[0].mxu0
    %v326 = vadd.f32 0.0, %v325
    %v327 = vpop.f32.mrb[0].mxu0
    %v328 = vadd.f32 0.0, %v327
    %329 = vdwg.mxu0
    %v331 = vcombine.high %v53, %v53
    %v333 = vsub.f32 %v326, %v53
    %v334 = vsub.f32 %v328, %v331
    %v335 = vmul.f32 %v333, %v333
    %v336 = vmul.f32 %v334, %v334
    %v337 = vadd.f32 %v335, 0.0
    %v338 = vadd.f32 %v336, 0.0
    %s339 = scalar_lea.vmem %s2, 8
    %v340 = vld [vmem:[%s339] sm:$0x77]
    %s341 = scalar_lea.vmem %s3, 8
    %v342 = vld [vmem:[%s341] sm:$0x77]
    %v343 = vmul.f32 %v340, 2.0
    %v344 = vsub.f32 %v343, 1.0
    %s345 = sld [smem:[#allocation2 + $0x1]]
    %s346 = sld [smem:[#allocation5 + $0x1]]
    %v347 = vstv %s345
    %v348 = vmul.f32 %v347, %v344
    %v349 = vstv %s346
    %v350 = vmul.f32 %v349, %v342
    %v351 = vadd.f32 %v348, %v350
    %v352 = vld [vmem:[%s4] sm:$0xff]
    %v353 = vld [vmem:[%s4 + $0x8] sm:$0xff]
    %v354 = vld [vmem:[%s4 + $0x10] sm:$0xff]
    %v355 = vld [vmem:[%s4 + $0x18] sm:$0xff]
    %v357 = vlaneseq
    %v358 = vshrl.u32 %v357, 7
    %v359 = vsub.s32 0, %v358
    %v360 = vrot.slane %v351, %v359
    %v361 = vlaneseq
    %v362 = vshrl.u32 %v361, 7
    %v363 = vsub.s32 4, %v362
    %v364 = vrot.slane %v351, %v363
    %v367 = vlaneseq
    %v368 = vshrl.u32 %v367, 7
    %v369 = vsub.s32 0, %v368
    %v370 = vrot.slane %v360, %v369
    %v371 = vlaneseq
    %v372 = vshrl.u32 %v371, 7
    %v373 = vsub.s32 0, %v372
    %v374 = vrot.slane %v364, %v373
    %v375 = vmul.f32 %v74, %v370
    %v376 = vmul.f32 %v74, %v374
    %v377 = vmul.f32 %v79, %v370
    %v378 = vmul.f32 %v79, %v374
    %v379 = vmul.f32 %v84, %v370
    %v380 = vmul.f32 %v84, %v374
    %v381 = vmul.f32 %v89, %v370
    %v382 = vmul.f32 %v89, %v374
    %384 = vset.pattern.permute.xlu0 1
    %385 = vperm.xlu0 %384, %v352
    %v386 = vpop.permute.xlu0 %385
    %389 = vset.pattern.permute.xlu0 1
    %390 = vperm.xlu0 %389, %v353
    %v391 = vpop.permute.xlu0 %390
    %394 = vset.pattern.permute.xlu0 1
    %395 = vperm.xlu0 %394, %v354
    %v396 = vpop.permute.xlu0 %395
    %399 = vset.pattern.permute.xlu0 1
    %400 = vperm.xlu0 %399, %v355
    %v401 = vpop.permute.xlu0 %400
    %v403 = vadd.f32 %v386, %v375
    %v404 = vadd.f32 %v386, %v376
    %v405 = vadd.f32 %v391, %v377
    %v406 = vadd.f32 %v391, %v378
    %v407 = vadd.f32 %v396, %v379
    %v408 = vadd.f32 %v396, %v380
    %v409 = vadd.f32 %v401, %v381
    %v410 = vadd.f32 %v401, %v382
    %v411 = vlaneseq
    %v412 = vshrl.u32 %v411, 7
    %v413 = vsub.s32 1, %v412
    %v414 = vrot.slane %v351, %v413
    %v415 = vlaneseq
    %v416 = vshrl.u32 %v415, 7
    %v417 = vsub.s32 5, %v416
    %v418 = vrot.slane %v351, %v417
    %v421 = vlaneseq
    %v422 = vshrl.u32 %v421, 7
    %v423 = vsub.s32 1, %v422
    %v424 = vrot.slane %v414, %v423
    %v425 = vlaneseq
    %v426 = vshrl.u32 %v425, 7
    %v427 = vsub.s32 1, %v426
    %v428 = vrot.slane %v418, %v427
    %v429 = vmul.f32 %v148, %v424
    %v430 = vmul.f32 %v148, %v428
    %v431 = vmul.f32 %v152, %v424
    %v432 = vmul.f32 %v152, %v428
    %v433 = vmul.f32 %v156, %v424
    %v434 = vmul.f32 %v156, %v428
    %v435 = vmul.f32 %v160, %v424
    %v436 = vmul.f32 %v160, %v428
    %v437 = vadd.f32 %v403, %v429
    %v438 = vadd.f32 %v404, %v430
    %v439 = vadd.f32 %v405, %v431
    %v440 = vadd.f32 %v406, %v432
    %v441 = vadd.f32 %v407, %v433
    %v442 = vadd.f32 %v408, %v434
    %v443 = vadd.f32 %v409, %v435
    %v444 = vadd.f32 %v410, %v436
    %v445 = vlaneseq
    %v446 = vshrl.u32 %v445, 7
    %v447 = vsub.s32 2, %v446
    %v448 = vrot.slane %v351, %v447
    %v449 = vlaneseq
    %v450 = vshrl.u32 %v449, 7
    %v451 = vsub.s32 6, %v450
    %v452 = vrot.slane %v351, %v451
    %v455 = vlaneseq
    %v456 = vshrl.u32 %v455, 7
    %v457 = vsub.s32 2, %v456
    %v458 = vrot.slane %v448, %v457
    %v459 = vlaneseq
    %v460 = vshrl.u32 %v459, 7
    %v461 = vsub.s32 2, %v460
    %v462 = vrot.slane %v452, %v461
    %v463 = vmul.f32 %v198, %v458
    %v464 = vmul.f32 %v198, %v462
    %v465 = vmul.f32 %v202, %v458
    %v466 = vmul.f32 %v202, %v462
    %v467 = vmul.f32 %v206, %v458
    %v468 = vmul.f32 %v206, %v462
    %v469 = vmul.f32 %v210, %v458
    %v470 = vmul.f32 %v210, %v462
    %v471 = vadd.f32 %v437, %v463
    %v472 = vadd.f32 %v438, %v464
    %v473 = vadd.f32 %v439, %v465
    %v474 = vadd.f32 %v440, %v466
    %v475 = vadd.f32 %v441, %v467
    %v476 = vadd.f32 %v442, %v468
    %v477 = vadd.f32 %v443, %v469
    %v478 = vadd.f32 %v444, %v470
    %v479 = vmax.f32 %v471, 0.0
    %v480 = vmax.f32 %v472, 0.0
    %v481 = vmax.f32 %v473, 0.0
    %v482 = vmax.f32 %v474, 0.0
    %v483 = vmax.f32 %v475, 0.0
    %v484 = vmax.f32 %v476, 0.0
    %v485 = vmax.f32 %v477, 0.0
    %v486 = vmax.f32 %v478, 0.0
    %487 = vmatprep.subr.mxu0 %v480
    %488 = vmatpush1.msra.mxu0 %v479
    %489 = vmatprep.subr.mxu0 %v482
    %490 = vmatpush1.msra.mxu0 %v481
    %491 = vmatprep.subr.mxu0 %v484
    %492 = vmatpush1.msra.mxu0 %v483
    %493 = vmatprep.subr.mxu0 %v486
    %494 = vmatpush1.msra.mxu0 %v485
    %495 = vmatprep.subr.mxu0 0.0
    %496 = vmatpush1.msra.mxu0 0.0
    %497 = vmatprep.subr.mxu0 0.0
    %498 = vmatpush1.msra.mxu0 0.0
    %499 = vmatprep.subr.mxu0 0.0
    %500 = vmatpush1.msra.mxu0 0.0
    %501 = vmatprep.subr.mxu0 0.0
    %502 = vmatpush1.msra.mxu0 0.0
    %503 = vmatprep.subr.mxu0 0.0
    %504 = vmatpush1.msra.mxu0 0.0
    %505 = vmatprep.subr.mxu0 0.0
    %506 = vmatpush1.msra.mxu0 0.0
    %507 = vmatprep.subr.mxu0 0.0
    %508 = vmatpush1.msra.mxu0 0.0
    %509 = vmatprep.subr.mxu0 0.0
    %510 = vmatpush1.msra.mxu0 0.0
    %511 = vmatprep.subr.mxu0 0.0
    %512 = vmatpush1.msra.mxu0 0.0
    %513 = vmatprep.subr.mxu0 0.0
    %514 = vmatpush1.msra.mxu0 0.0
    %515 = vmatprep.subr.mxu0 0.0
    %516 = vmatpush1.msra.mxu0 0.0
    %517 = vmatprep.subr.mxu0 0.0
    %518 = vmatpush1.msra.mxu0 0.0
    %519 = vmatprep.subr.mxu0 0.0
    %520 = vmatpush1.msra.mxu0 0.0
    %521 = vmatprep.subr.mxu0 0.0
    %522 = vmatpush1.msra.mxu0 0.0
    %523 = vmatprep.subr.mxu0 0.0
    %524 = vmatpush1.msra.mxu0 0.0
    %525 = vmatprep.subr.mxu0 0.0
    %526 = vmatpush1.msra.mxu0 0.0
    %527 = vmatprep.subr.mxu0 0.0
    %528 = vmatpush1.msra.mxu0 0.0
    %529 = vmatprep.subr.mxu0 0.0
    %530 = vmatpush1.msra.mxu0 0.0
    %531 = vmatprep.subr.mxu0 0.0
    %532 = vmatpush1.msra.mxu0 0.0
    %533 = vmatprep.subr.mxu0 0.0
    %534 = vmatpush1.msra.mxu0 0.0
    %535 = vmatprep.subr.mxu0 0.0
    %536 = vmatpush1.msra.mxu0 0.0
    %537 = vmatprep.subr.mxu0 0.0
    %538 = vmatpush1.msra.mxu0 0.0
    %539 = vmatprep.subr.mxu0 0.0
    %540 = vmatpush1.msra.mxu0 0.0
    %541 = vmatprep.subr.mxu0 0.0
    %542 = vmatpush1.msra.mxu0 0.0
    %543 = vmatprep.subr.mxu0 0.0
    %544 = vmatpush1.msra.mxu0 0.0
    %545 = vmatprep.subr.mxu0 0.0
    %546 = vmatpush1.msra.mxu0 0.0
    %547 = vmatprep.subr.mxu0 0.0
    %548 = vmatpush1.msra.mxu0 0.0
    %549 = vmatprep.subr.mxu0 0.0
    %550 = vmatpush1.msra.mxu0 0.0
    %551 = vmatprep.mubr.f32.mxu0 0.0
    %552 = vmatmul.mubr.f32.gmra.mrb[0].mxu0 %v257
    %v553 = vpop.f32.mrb[0].mxu0
    %v554 = vadd.f32 0.0, %v553
    %v555 = vpop.f32.mrb[0].mxu0
    %v556 = vadd.f32 0.0, %v555
    %557 = vdwg.mxu0
    %v559 = vcombine.high %v342, %v342
    %v561 = vsub.f32 %v554, %v342
    %v562 = vsub.f32 %v556, %v559
    %v563 = vmul.f32 %v561, %v561
    %v564 = vmul.f32 %v562, %v562
    %v565 = vadd.f32 %v337, %v563
    %v566 = vadd.f32 %v338, %v564
    %vm567 = vcmask 1042432
    %v568 = vsel %vm567, %v565, 0.0
    %v569 = vsel %vm567, %v566, 0.0
    %v570 = vadd.f32 %v568, %v569
    %571 = vadd.xlane.f32.xlu0 %v570
    %v572 = vpop.xlane.xlu0 %571
    %v573 = vrot.slane %v572, 4
    %v574 = vadd.f32 %v572, %v573
    %v575 = vrot.slane %v574, 2
    %v576 = vadd.f32 %v574, %v575
    %v577 = vrot.slane %v576, 1
    %v578 = vadd.f32 %v576, %v577
    %s579 = vtos %v578
    %s580 = smul.f32 %s579, 0.0006510417
    %v581 = vstv %s580
    %vm582 = vcmask 0
    %583 = vst.msk [vmem:[#allocation7] sm:$0x1] %vm582, %v581
    // Predicated region
    $region38: #{tpu_custom_call.1} parent=1 // pred_check
      _
    $region39: #{tpu_custom_call.1} parent=1 // pred_check_branch
      %585 = sbr.rel (0) target = $region41
    $region40: #{tpu_custom_call.1} parent=1 // pred_region
      %s587 = ssub.s32 16, 16
      %588 = vsyncadd [#allocation3], %s587
      %s590 = sshll.u32 [#allocation7], 4
      %s591 = int_to_ptr.vmem [resolvable:$true] %s590
      %593 = dma.vmem_to_hbm [thread:$0]  %s591, 16, %s7, [#allocation3]
    $region41: #{tpu_custom_call.1} parent=1 // pred_fallthru
      _
    // Predicated region
    $region42: #{tpu_custom_call.1} parent=1 // pred_check
      _
    $region43: #{tpu_custom_call.1} parent=1 // pred_check_branch
      %595 = sbr.rel (0) target = $region45
    $region44: #{tpu_custom_call.1} parent=1 // pred_region
      %596 = dma.done [#allocation3], 16
    $region45: #{tpu_custom_call.1} parent=1 // pred_fallthru
      _
    %597 = vsyncpa [#allocation3], 1
    %598 = vsyncpa [#allocation4], 1
    %599 = vsyncpa [#allocation6], 1

</llo_original>
